<compile_context>
chip_gen: v7x
topology: tpu7x:2x2x1
jax: 0.10.0
libtpu: 0.0.40
codegen_flags: <defaults>
</compile_context>

<pallas_src>
import functools

import jax
import jax.numpy as jnp
from jax.experimental import pallas as pl
from jax.experimental.pallas import tpu as pltpu


def _make_kernel(with_mask: bool):
    """Build the kernel body (softmax over the full S axis of one batch tile)."""

    def kernel(*refs):
        if with_mask:
            q_ref, k_ref, m_ref, o_ref = refs
        else:
            q_ref, k_ref, o_ref = refs

        q = q_ref[...].astype(jnp.float32)               # (TB, D)
        k = k_ref[...].astype(jnp.float32)               # (TB, S, D)

        # F.normalize clamp: 1 / max(||v||, 1e-12) == rsqrt(max(||v||^2, 1e-24))
        eps_sq = jnp.float32(1e-24)

        q_sq = jnp.sum(q * q, axis=-1, keepdims=True)    # (TB, 1) -- tiny
        qn = q * jax.lax.rsqrt(jnp.maximum(q_sq, eps_sq))

        # Batched contraction over D on the MXU: per batch row, (S, D) @ (D, 1).
        # Keeps the small-D contraction off the VPU/XLU (no (TB,S,D) broadcast
        # of qn, no cross-lane reduce over a 32-wide lane axis).
        dn = (((2,), (1,)), ((0,), (0,)))
        dot = jax.lax.dot_general(
            k, qn[:, :, None], dn,
            preferred_element_type=jnp.float32)[:, :, 0]                 # (TB, S)
        ones = jnp.ones_like(qn)[:, :, None]                             # (TB, D, 1)
        k_sq = jax.lax.dot_general(
            k * k, ones, dn,
            preferred_element_type=jnp.float32)[:, :, 0]                 # (TB, S)

        # Key normalization folded into the score (no normalized-keys tensor).
        scores = dot * jax.lax.rsqrt(jnp.maximum(k_sq, eps_sq))

        if with_mask:
            # Exact PyTorch semantics: scores - (~mask)*1e30.
            # m is 1.0 (keep) / 0.0 (masked).
            m = m_ref[...].astype(jnp.float32)
            scores = scores - (jnp.float32(1.0) - m) * jnp.float32(1e30)

        # Numerically stable softmax over S (lane axis).  Exact division so the
        # rows sum to 1 tightly; this kernel is DMA-bound, so approx reciprocal
        # would only cost accuracy.
        mx = jnp.max(scores, axis=-1, keepdims=True)
        e = jnp.exp(scores - mx)
        denom = jnp.sum(e, axis=-1, keepdims=True)
        o_ref[...] = (e / denom).astype(o_ref.dtype)

    return kernel


def _pick_block_b(B: int, S: int, D: int, itemsize: int) -> int:
    """Batch rows per grid step."""
    if B <= 8:
        return B                                    # single block, full batch dim
    row_bytes = max(1, S * D * itemsize)            # one batch row of keys in HBM
    # ~8 MiB of keys per pipeline buffer (double-buffered) stays well inside a
    # 48 MiB scoped-VMEM budget (v7x has 64 MiB physical; v5e/v6e have 128).
    vmem_rows = (8 * 1024 * 1024) // row_bytes
    # Keep >=4 grid steps when B allows it (megacore sharding on v7x + DMA
    # pipeline overlap).
    steps_rows = -(-B // 4)
    tb = min(max(8, min(vmem_rows, steps_rows)), B)
    return max(8, (tb // 8) * 8)                    # sublane-aligned tile


@functools.partial(jax.jit, static_argnames=("block_b", "with_mask"))
def _cosine_attention_impl(query, keys, mask, *, block_b, with_mask):
    B, D = query.shape
    _, S, _ = keys.shape

    in_specs = [
        pl.BlockSpec((block_b, D), lambda b: (b, 0)),        # query rows
        pl.BlockSpec((block_b, S, D), lambda b: (b, 0, 0)),  # keys slab (full S, D)
    ]
    args = [query, keys]
    if with_mask:
        in_specs.append(pl.BlockSpec((block_b, S), lambda b: (b, 0)))
        args.append(mask)

    return pl.pallas_call(
        _make_kernel(with_mask),
        out_shape=jax.ShapeDtypeStruct((B, S), jnp.float32),
        grid_spec=pltpu.PrefetchScalarGridSpec(
            num_scalar_prefetch=0,
            grid=(pl.cdiv(B, block_b),),       # ragged last block handled by Pallas
            in_specs=in_specs,
            out_specs=pl.BlockSpec((block_b, S), lambda b: (b, 0)),
        ),
        compiler_params=pltpu.CompilerParams(
            dimension_semantics=("parallel",),     # batch tiles shard across TCs (v7x)
            vmem_limit_bytes=48 * 1024 * 1024,     # safe on v5e/v6e/v7x
        ),
    )(*args)


def cosine_attention(query: jax.Array,
                     keys: jax.Array,
                     mask: jax.Array | None = None,
                     *,
                     block_b: int | None = None) -> jax.Array:
    """query: (B, D), keys: (B, S, D), mask: (B, S) bool or None -> (B, S) f32."""
    B, D = query.shape
    Bk, S, Dk = keys.shape
    assert Bk == B and Dk == D
    if mask is not None:
        assert mask.shape == (B, S)

    if block_b is None:
        block_b = _pick_block_b(B, S, D, jnp.dtype(keys.dtype).itemsize)
    block_b = int(min(block_b, B))
    if block_b < B:
        # query/mask/out blocks need a sublane-aligned second-to-last dim unless
        # the block spans the whole batch.
        block_b = max(8, (block_b // 8) * 8)

    # Mask streamed as a tiny (B, S) 0/1 f32 tile (1/D of the keys traffic).
    # TODO(synk): an int8 mask would shave ~2% more HBM traffic.
    mask_f = None if mask is None else mask.astype(jnp.float32)

    return _cosine_attention_impl(query, keys, mask_f,
                                  block_b=block_b, with_mask=mask is not None)


def _reference(query, keys, mask):
    eps = 1e-12
    qn = query / jnp.maximum(jnp.linalg.norm(query, axis=-1, keepdims=True), eps)
    kn = keys / jnp.maximum(jnp.linalg.norm(keys, axis=-1, keepdims=True), eps)
    scores = jnp.einsum("bsd,bd->bs", kn, qn)
    if mask is not None:
        scores = scores - (~mask).astype(jnp.float32) * 1e30
    return jax.nn.softmax(scores, axis=-1)


if __name__ == "__main__":
    root = jax.random.PRNGKey(0)

    def check(B, S, D, use_mask, key):
        kq, kk, km = jax.random.split(key, 3)
        query = jax.random.normal(kq, (B, D), dtype=jnp.float32)
        keys = jax.random.normal(kk, (B, S, D), dtype=jnp.float32)
        mask = (jax.random.uniform(km, (B, S)) > 0.25) if use_mask else None

        out = jax.block_until_ready(cosine_attention(query, keys, mask))
        ref = _reference(query, keys, mask)

        assert out.shape == (B, S)
        assert jnp.allclose(out, ref, atol=2e-3, rtol=2e-3)
        assert jnp.allclose(jnp.sum(out, axis=-1), 1.0, atol=2e-3)

    k1, k2, k3, k4 = jax.random.split(root, 4)
    # Small shapes consistent with the module.
    check(B=2, S=8, D=32, use_mask=True, key=k1)
    check(B=2, S=8, D=32, use_mask=False, key=k2)
    # Ragged paths: B not a multiple of the batch tile, S not a multiple of 128.
    check(B=10, S=130, D=32, use_mask=True, key=k3)
    check(B=10, S=130, D=32, use_mask=False, key=k4)

    print("KERNEL_OK")
</pallas_src>

<mosaic_0001>
module attributes {stable_mosaic.version = 11 : i64} {
  func.func @kernel(%arg0: i32, %arg1: memref<2x32xf32, #tpu.memory_space<vmem>>, %arg2: memref<2x8x32xf32, #tpu.memory_space<vmem>>, %arg3: memref<2x8xf32, #tpu.memory_space<vmem>>, %arg4: memref<2x8xf32, #tpu.memory_space<vmem>>) attributes {dimension_semantics = [#tpu.dimension_semantics<parallel>], iteration_bounds = array<i64: 1>, scalar_prefetch = 0 : i64, scratch_operands = 0 : i64, tpu.core_type = #tpu.core_type<tc>, window_params = [{transform_indices = @transform_0, window_bounds = array<i64: 2, 32>}, {transform_indices = @transform_1, window_bounds = array<i64: 2, 8, 32>}, {transform_indices = @transform_2, window_bounds = array<i64: 2, 8>}, {transform_indices = @transform_3, window_bounds = array<i64: 2, 8>}]} {
    %c0 = arith.constant 0 : index
    %c0_0 = arith.constant 0 : index
    %0 = vector.load %arg1[%c0, %c0_0] : memref<2x32xf32, #tpu.memory_space<vmem>>, vector<2x32xf32>
    %c0_1 = arith.constant 0 : index
    %c0_2 = arith.constant 0 : index
    %c0_3 = arith.constant 0 : index
    %1 = vector.load %arg2[%c0_1, %c0_2, %c0_3] : memref<2x8x32xf32, #tpu.memory_space<vmem>>, vector<2x8x32xf32>
    %2 = arith.mulf %0, %0 : vector<2x32xf32>
    %cst = arith.constant dense<0.000000e+00> : vector<2xf32>
    %3 = vector.multi_reduction <add>, %2, %cst [1] : vector<2x32xf32> to vector<2xf32>
    %4 = vector.shape_cast %3 : vector<2xf32> to vector<2x1xf32>
    %cst_4 = arith.constant 1.000000e-24 : f32
    %5 = vector.broadcast %cst_4 : f32 to vector<2x1xf32>
    %6 = arith.maximumf %4, %5 : vector<2x1xf32>
    %7 = math.rsqrt %6 : vector<2x1xf32>
    %8 = vector.broadcast %7 : vector<2x1xf32> to vector<2x32xf32>
    %9 = arith.mulf %0, %8 : vector<2x32xf32>
    %10 = vector.shape_cast %9 : vector<2x32xf32> to vector<2x32x1xf32>
    %cst_5 = arith.constant dense<0.000000e+00> : vector<2x8x1xf32>
    %11 = tpu.matmul %1, %10, %cst_5 {dimension_numbers = #tpu.dot_dimension_numbers<[2], [1], [1], [2], [0, 0, 0, 1, 1, 2], [0], [0]>} : vector<2x8x32xf32>, vector<2x32x1xf32>, vector<2x8x1xf32> -> vector<2x8x1xf32>
    %12 = vector.shape_cast %11 : vector<2x8x1xf32> to vector<2x8xf32>
    %cst_6 = arith.constant 1.000000e+00 : f32
    %13 = vector.broadcast %cst_6 : f32 to vector<2x32xf32>
    %14 = vector.shape_cast %13 : vector<2x32xf32> to vector<2x32x1xf32>
    %15 = arith.mulf %1, %1 : vector<2x8x32xf32>
    %cst_7 = arith.constant dense<0.000000e+00> : vector<2x8x1xf32>
    %16 = tpu.matmul %15, %14, %cst_7 {dimension_numbers = #tpu.dot_dimension_numbers<[2], [1], [1], [2], [0, 0, 0, 1, 1, 2], [0], [0]>} : vector<2x8x32xf32>, vector<2x32x1xf32>, vector<2x8x1xf32> -> vector<2x8x1xf32>
    %17 = vector.shape_cast %16 : vector<2x8x1xf32> to vector<2x8xf32>
    %cst_8 = arith.constant 1.000000e-24 : f32
    %18 = vector.broadcast %cst_8 : f32 to vector<2x8xf32>
    %19 = arith.maximumf %17, %18 : vector<2x8xf32>
    %20 = math.rsqrt %19 : vector<2x8xf32>
    %21 = arith.mulf %12, %20 : vector<2x8xf32>
    %c0_9 = arith.constant 0 : index
    %c0_10 = arith.constant 0 : index
    %22 = vector.load %arg3[%c0_9, %c0_10] : memref<2x8xf32, #tpu.memory_space<vmem>>, vector<2x8xf32>
    %cst_11 = arith.constant 1.000000e+00 : f32
    %23 = vector.broadcast %cst_11 : f32 to vector<2x8xf32>
    %24 = arith.subf %23, %22 : vector<2x8xf32>
    %cst_12 = arith.constant 1.000000e+30 : f32
    %25 = vector.broadcast %cst_12 : f32 to vector<2x8xf32>
    %26 = arith.mulf %24, %25 : vector<2x8xf32>
    %27 = arith.subf %21, %26 : vector<2x8xf32>
    %cst_13 = arith.constant dense<0xFF800000> : vector<2xf32>
    %28 = vector.multi_reduction <maximumf>, %27, %cst_13 [1] : vector<2x8xf32> to vector<2xf32>
    %29 = vector.shape_cast %28 : vector<2xf32> to vector<2x1xf32>
    %30 = vector.broadcast %29 : vector<2x1xf32> to vector<2x8xf32>
    %31 = arith.subf %27, %30 : vector<2x8xf32>
    %32 = math.exp %31 : vector<2x8xf32>
    %cst_14 = arith.constant dense<0.000000e+00> : vector<2xf32>
    %33 = vector.multi_reduction <add>, %32, %cst_14 [1] : vector<2x8xf32> to vector<2xf32>
    %34 = vector.shape_cast %33 : vector<2xf32> to vector<2x1xf32>
    %35 = vector.broadcast %34 : vector<2x1xf32> to vector<2x8xf32>
    %36 = arith.divf %32, %35 : vector<2x8xf32>
    %c0_15 = arith.constant 0 : index
    %c0_16 = arith.constant 0 : index
    %37 = vector.load %arg4[%c0_15, %c0_16] : memref<2x8xf32, #tpu.memory_space<vmem>>, vector<2x8xf32>
    tpu.vector_store %arg4[%c0_15, %c0_16], %36 {strides = array<i32>} : memref<2x8xf32, #tpu.memory_space<vmem>>, vector<2x8xf32>,
    return
  }
  func.func @transform_0(%arg0: i32) -> (i32, i32) {
    %c0_i32 = arith.constant 0 : i32
    %c0_i32_0 = arith.constant 0 : i32
    return %arg0, %c0_i32 : i32, i32
  }
  func.func @transform_1(%arg0: i32) -> (i32, i32, i32) {
    %c0_i32 = arith.constant 0 : i32
    %c0_i32_0 = arith.constant 0 : i32
    %c0_i32_1 = arith.constant 0 : i32
    return %arg0, %c0_i32, %c0_i32_0 : i32, i32, i32
  }
  func.func @transform_2(%arg0: i32) -> (i32, i32) {
    %c0_i32 = arith.constant 0 : i32
    %c0_i32_0 = arith.constant 0 : i32
    return %arg0, %c0_i32 : i32, i32
  }
  func.func @transform_3(%arg0: i32) -> (i32, i32) {
    %c0_i32 = arith.constant 0 : i32
    %c0_i32_0 = arith.constant 0 : i32
    return %arg0, %c0_i32 : i32, i32
  }
}

</mosaic_0001>

<llo_original>
// kernel: _cosine_attention_impl.1
$region0: #{_cosine_attention_impl.1}
  #allocation0 [shape = 'u32[]', space=smem, size = 0x4, offset = 0x4, fixed_abs, tag = 'smem constant byte address 0x4 - core index']
  #allocation1 [shape = 'u32[144,128]{1,0:T(1,128)}', space=vmem, size = 0x12000, scoped, tag = 'internal scratch']
  %s0 = inlined_call_operand.hbm [shape: f32[2,32], index: 0, kind: input, shape index: {}]
  %s1 = inlined_call_operand.hbm [shape: f32[2,8,32], index: 1, kind: input, shape index: {}]
  %s2 = inlined_call_operand.vmem [shape: f32[2,8], index: 2, kind: input, shape index: {}]
  %s3 = inlined_call_operand.hbm [shape: f32[2,8], index: 3, kind: output, shape index: {}]
  %s4 = sld [smem:[#allocation0]]
  $region30: #{_cosine_attention_impl.1} parent=0
    _
  %s6 = ssub.s32 1, %s4
  %s7 = scalar_select 0, %s6, %s4
  $region1: #{_cosine_attention_impl.1} parent=0
    #allocation2 [shape = 'u8[1024]{0}', space=vmem, size = 0x400, scoped, tag = 'input window, operand 0, single buffered']
    #allocation3 [shape = 's32[1]{0}', space=sflag, size = 0x4, scoped, tag = 'scoped memory for _cosine_attention_impl.1']
    #allocation4 [shape = 's32[1]{0}', space=sflag, size = 0x4, scoped, tag = 'scoped memory for _cosine_attention_impl.1']
    #allocation5 [shape = 'u8[8192]{0}', space=vmem, size = 0x2000, scoped, tag = 'input window, operand 1, single buffered']
    #allocation6 [shape = 's32[1]{0}', space=sflag, size = 0x4, scoped, tag = 'scoped memory for _cosine_attention_impl.1']
    #allocation7 [shape = 'u8[1024]{0}', space=vmem, size = 0x400, scoped, tag = 'output window, operand 0, single buffered']
    %8 = vsyncpa [#allocation3], 0
    %9 = vsyncpa [#allocation6], 0
    %10 = vsyncpa [#allocation4], 0
    // Predicated region
    $region2: #{_cosine_attention_impl.1} parent=1 // pred_check
      _
    $region3: #{_cosine_attention_impl.1} parent=1 // pred_check_branch
      %12 = sbr.rel (0) target = $region5
    $region4: #{_cosine_attention_impl.1} parent=1 // pred_region
      %s14 = ssub.s32 32, 32
      %15 = vsyncadd [#allocation3], %s14
      %s17 = sshll.u32 [#allocation2], 4
      %s18 = int_to_ptr.vmem [resolvable:$true] %s17
      %20 = dma.hbm_to_vmem [thread:$0]  %s0, 32, %s18, [#allocation3]
    $region5: #{_cosine_attention_impl.1} parent=1 // pred_fallthru
      _
    // Predicated region
    $region6: #{_cosine_attention_impl.1} parent=1 // pred_check
      _
    $region7: #{_cosine_attention_impl.1} parent=1 // pred_check_branch
      %22 = sbr.rel (0) target = $region9
    $region8: #{_cosine_attention_impl.1} parent=1 // pred_region
      %s24 = ssub.s32 256, 256
      %25 = vsyncadd [#allocation6], %s24
      %s26 = sshll.u32 [#allocation5], 4
      %s27 = int_to_ptr.vmem [resolvable:$true] %s26
      %32 = dma.hbm_to_vmem [thread:$0]  %s1, 256, %s27, [#allocation6], 128, 128, 8
    $region9: #{_cosine_attention_impl.1} parent=1 // pred_fallthru
      _
    // Predicated region
    $region10: #{_cosine_attention_impl.1} parent=1 // pred_check
      _
    $region11: #{_cosine_attention_impl.1} parent=1 // pred_check_branch
      %34 = sbr.rel (0) target = $region13
    $region12: #{_cosine_attention_impl.1} parent=1 // pred_region
      _
    $region13: #{_cosine_attention_impl.1} parent=1 // pred_fallthru
      _
    // Predicated region
    $region14: #{_cosine_attention_impl.1} parent=1 // pred_check
      _
    $region15: #{_cosine_attention_impl.1} parent=1 // pred_check_branch
      %36 = sbr.rel (0) target = $region17
    $region16: #{_cosine_attention_impl.1} parent=1 // pred_region
      %37 = dma.done [#allocation3], 32
    $region17: #{_cosine_attention_impl.1} parent=1 // pred_fallthru
      _
    // Predicated region
    $region18: #{_cosine_attention_impl.1} parent=1 // pred_check
      _
    $region19: #{_cosine_attention_impl.1} parent=1 // pred_check_branch
      %39 = sbr.rel (0) target = $region21
    $region20: #{_cosine_attention_impl.1} parent=1 // pred_region
      %40 = dma.done [#allocation6], 256
    $region21: #{_cosine_attention_impl.1} parent=1 // pred_fallthru
      _
    %v41 = vld [vmem:[#allocation2] sm:$0x3]
    %v42 = vld [vmem:[#allocation5] sm:$0xff]
    %v43 = vld [vmem:[#allocation5 + $0x8] sm:$0xff]
    %v44 = vmul.f32 %v41, %v41
    %vm45 = vcmask 254976
    %v46 = vsel %vm45, %v44, 0.0
    %47 = vadd.xlane.f32.xlu0 %v46
    %v48 = vpop.xlane.xlu0 %47
    %v49 = vmax.f32 %v48, 1e-24
    %v50 = vrsqrt.pop %v49
    %v51 = vmul.f32 %v41, %v50
    %v52 = vlaneseq
    %v53 = vshrl.u32 %v52, 7
    %v54 = vsub.s32 0, %v53
    %v55 = vrot.slane %v51, %v54
    %57 = vbcast.lane.b32.xlu0 %v55, 256
    %v58 = vpop.permute.xlu0 %57
    %s60 = sor.u32 256, 8
    %61 = vbcast.lane.b32.xlu0 %v55, %s60
    %v62 = vpop.permute.xlu0 %61
    %s64 = sor.u32 256, 16
    %65 = vbcast.lane.b32.xlu0 %v55, %s64
    %v66 = vpop.permute.xlu0 %65
    %s68 = sor.u32 256, 24
    %69 = vbcast.lane.b32.xlu0 %v55, %s68
    %v70 = vpop.permute.xlu0 %69
    %v71 = vlaneseq
    %v72 = vshrl.u32 %v71, 7
    %v73 = vsub.s32 1, %v72
    %v74 = vrot.slane %v51, %v73
    %76 = vbcast.lane.b32.xlu0 %v74, 256
    %v77 = vpop.permute.xlu0 %76
    %s79 = sor.u32 256, 8
    %80 = vbcast.lane.b32.xlu0 %v74, %s79
    %v81 = vpop.permute.xlu0 %80
    %s83 = sor.u32 256, 16
    %84 = vbcast.lane.b32.xlu0 %v74, %s83
    %v85 = vpop.permute.xlu0 %84
    %s87 = sor.u32 256, 24
    %88 = vbcast.lane.b32.xlu0 %v74, %s87
    %v89 = vpop.permute.xlu0 %88
    %vm90 = vcmask 261120
    %v92 = vsel %vm90, %v42, 0
    %94 = vmatprep.subr.mxu0 0.0
    %95 = vmatpush1.msra.mxu0 %v58
    %96 = vmatprep.subr.mxu0 0.0
    %97 = vmatpush1.msra.mxu0 %v62
    %98 = vmatprep.subr.mxu0 0.0
    %99 = vmatpush1.msra.mxu0 %v66
    %100 = vmatprep.subr.mxu0 0.0
    %101 = vmatpush1.msra.mxu0 %v70
    %102 = vmatprep.subr.mxu0 0.0
    %103 = vmatpush1.msra.mxu0 0.0
    %104 = vmatprep.subr.mxu0 0.0
    %105 = vmatpush1.msra.mxu0 0.0
    %106 = vmatprep.subr.mxu0 0.0
    %107 = vmatpush1.msra.mxu0 0.0
    %108 = vmatprep.subr.mxu0 0.0
    %109 = vmatpush1.msra.mxu0 0.0
    %110 = vmatprep.subr.mxu0 0.0
    %111 = vmatpush1.msra.mxu0 0.0
    %112 = vmatprep.subr.mxu0 0.0
    %113 = vmatpush1.msra.mxu0 0.0
    %114 = vmatprep.subr.mxu0 0.0
    %115 = vmatpush1.msra.mxu0 0.0
    %116 = vmatprep.subr.mxu0 0.0
    %117 = vmatpush1.msra.mxu0 0.0
    %118 = vmatprep.subr.mxu0 0.0
    %119 = vmatpush1.msra.mxu0 0.0
    %120 = vmatprep.subr.mxu0 0.0
    %121 = vmatpush1.msra.mxu0 0.0
    %122 = vmatprep.subr.mxu0 0.0
    %123 = vmatpush1.msra.mxu0 0.0
    %124 = vmatprep.subr.mxu0 0.0
    %125 = vmatpush1.msra.mxu0 0.0
    %126 = vmatprep.subr.mxu0 0.0
    %127 = vmatpush1.msra.mxu0 0.0
    %128 = vmatprep.subr.mxu0 0.0
    %129 = vmatpush1.msra.mxu0 0.0
    %130 = vmatprep.subr.mxu0 0.0
    %131 = vmatpush1.msra.mxu0 0.0
    %132 = vmatprep.subr.mxu0 0.0
    %133 = vmatpush1.msra.mxu0 0.0
    %134 = vmatprep.subr.mxu0 0.0
    %135 = vmatpush1.msra.mxu0 0.0
    %136 = vmatprep.subr.mxu0 0.0
    %137 = vmatpush1.msra.mxu0 0.0
    %138 = vmatprep.subr.mxu0 0.0
    %139 = vmatpush1.msra.mxu0 0.0
    %140 = vmatprep.subr.mxu0 0.0
    %141 = vmatpush1.msra.mxu0 0.0
    %142 = vmatprep.subr.mxu0 0.0
    %143 = vmatpush1.msra.mxu0 0.0
    %144 = vmatprep.subr.mxu0 0.0
    %145 = vmatpush1.msra.mxu0 0.0
    %146 = vmatprep.subr.mxu0 0.0
    %147 = vmatpush1.msra.mxu0 0.0
    %148 = vmatprep.subr.mxu0 0.0
    %149 = vmatpush1.msra.mxu0 0.0
    %150 = vmatprep.subr.mxu0 0.0
    %151 = vmatpush1.msra.mxu0 0.0
    %152 = vmatprep.subr.mxu0 0.0
    %153 = vmatpush1.msra.mxu0 0.0
    %154 = vmatprep.subr.mxu0 0.0
    %155 = vmatpush1.msra.mxu0 0.0
    %156 = vmatprep.subr.mxu0 0.0
    %157 = vmatpush1.msra.mxu0 0.0
    %158 = vmatprep.mubr.f32.mxu0 0.0
    %159 = vmatmul.mubr.f32.gmra.mrb[0].mxu0 %v92
    %v160 = vpop.f32.mrb[0].mxu0
    %v161 = vadd.f32 0.0, %v160
    %v162 = vpop.f32.mrb[0].mxu0
    %163 = vdwg.mxu0
    %v165 = vsel %vm90, %v43, 0
    %167 = vmatprep.subr.mxu0 0.0
    %168 = vmatpush1.msra.mxu0 %v77
    %169 = vmatprep.subr.mxu0 0.0
    %170 = vmatpush1.msra.mxu0 %v81
    %171 = vmatprep.subr.mxu0 0.0
    %172 = vmatpush1.msra.mxu0 %v85
    %173 = vmatprep.subr.mxu0 0.0
    %174 = vmatpush1.msra.mxu0 %v89
    %175 = vmatprep.subr.mxu0 0.0
    %176 = vmatpush1.msra.mxu0 0.0
    %177 = vmatprep.subr.mxu0 0.0
    %178 = vmatpush1.msra.mxu0 0.0
    %179 = vmatprep.subr.mxu0 0.0
    %180 = vmatpush1.msra.mxu0 0.0
    %181 = vmatprep.subr.mxu0 0.0
    %182 = vmatpush1.msra.mxu0 0.0
    %183 = vmatprep.subr.mxu0 0.0
    %184 = vmatpush1.msra.mxu0 0.0
    %185 = vmatprep.subr.mxu0 0.0
    %186 = vmatpush1.msra.mxu0 0.0
    %187 = vmatprep.subr.mxu0 0.0
    %188 = vmatpush1.msra.mxu0 0.0
    %189 = vmatprep.subr.mxu0 0.0
    %190 = vmatpush1.msra.mxu0 0.0
    %191 = vmatprep.subr.mxu0 0.0
    %192 = vmatpush1.msra.mxu0 0.0
    %193 = vmatprep.subr.mxu0 0.0
    %194 = vmatpush1.msra.mxu0 0.0
    %195 = vmatprep.subr.mxu0 0.0
    %196 = vmatpush1.msra.mxu0 0.0
    %197 = vmatprep.subr.mxu0 0.0
    %198 = vmatpush1.msra.mxu0 0.0
    %199 = vmatprep.subr.mxu0 0.0
    %200 = vmatpush1.msra.mxu0 0.0
    %201 = vmatprep.subr.mxu0 0.0
    %202 = vmatpush1.msra.mxu0 0.0
    %203 = vmatprep.subr.mxu0 0.0
    %204 = vmatpush1.msra.mxu0 0.0
    %205 = vmatprep.subr.mxu0 0.0
    %206 = vmatpush1.msra.mxu0 0.0
    %207 = vmatprep.subr.mxu0 0.0
    %208 = vmatpush1.msra.mxu0 0.0
    %209 = vmatprep.subr.mxu0 0.0
    %210 = vmatpush1.msra.mxu0 0.0
    %211 = vmatprep.subr.mxu0 0.0
    %212 = vmatpush1.msra.mxu0 0.0
    %213 = vmatprep.subr.mxu0 0.0
    %214 = vmatpush1.msra.mxu0 0.0
    %215 = vmatprep.subr.mxu0 0.0
    %216 = vmatpush1.msra.mxu0 0.0
    %217 = vmatprep.subr.mxu0 0.0
    %218 = vmatpush1.msra.mxu0 0.0
    %219 = vmatprep.subr.mxu0 0.0
    %220 = vmatpush1.msra.mxu0 0.0
    %221 = vmatprep.subr.mxu0 0.0
    %222 = vmatpush1.msra.mxu0 0.0
    %223 = vmatprep.subr.mxu0 0.0
    %224 = vmatpush1.msra.mxu0 0.0
    %225 = vmatprep.subr.mxu0 0.0
    %226 = vmatpush1.msra.mxu0 0.0
    %227 = vmatprep.subr.mxu0 0.0
    %228 = vmatpush1.msra.mxu0 0.0
    %229 = vmatprep.subr.mxu0 0.0
    %230 = vmatpush1.msra.mxu0 0.0
    %231 = vmatprep.mubr.f32.mxu0 0.0
    %232 = vmatmul.mubr.f32.gmra.mrb[0].mxu0 %v165
    %v233 = vpop.f32.mrb[0].mxu0
    %v234 = vadd.f32 0.0, %v233
    %v235 = vpop.f32.mrb[0].mxu0
    %236 = vdwg.mxu0
    %v237 = vmul.f32 %v42, %v42
    %v238 = vmul.f32 %v43, %v43
    %v240 = vsel %vm90, %v237, 0
    %242 = vmatprep.subr.mxu0 0.0
    %243 = vmatpush1.msra.mxu0 1.0
    %244 = vmatprep.subr.mxu0 0.0
    %245 = vmatpush1.msra.mxu0 1.0
    %246 = vmatprep.subr.mxu0 0.0
    %247 = vmatpush1.msra.mxu0 1.0
    %248 = vmatprep.subr.mxu0 0.0
    %249 = vmatpush1.msra.mxu0 1.0
    %250 = vmatprep.subr.mxu0 0.0
    %251 = vmatpush1.msra.mxu0 0.0
    %252 = vmatprep.subr.mxu0 0.0
    %253 = vmatpush1.msra.mxu0 0.0
    %254 = vmatprep.subr.mxu0 0.0
    %255 = vmatpush1.msra.mxu0 0.0
    %256 = vmatprep.subr.mxu0 0.0
    %257 = vmatpush1.msra.mxu0 0.0
    %258 = vmatprep.subr.mxu0 0.0
    %259 = vmatpush1.msra.mxu0 0.0
    %260 = vmatprep.subr.mxu0 0.0
    %261 = vmatpush1.msra.mxu0 0.0
    %262 = vmatprep.subr.mxu0 0.0
    %263 = vmatpush1.msra.mxu0 0.0
    %264 = vmatprep.subr.mxu0 0.0
    %265 = vmatpush1.msra.mxu0 0.0
    %266 = vmatprep.subr.mxu0 0.0
    %267 = vmatpush1.msra.mxu0 0.0
    %268 = vmatprep.subr.mxu0 0.0
    %269 = vmatpush1.msra.mxu0 0.0
    %270 = vmatprep.subr.mxu0 0.0
    %271 = vmatpush1.msra.mxu0 0.0
    %272 = vmatprep.subr.mxu0 0.0
    %273 = vmatpush1.msra.mxu0 0.0
    %274 = vmatprep.subr.mxu0 0.0
    %275 = vmatpush1.msra.mxu0 0.0
    %276 = vmatprep.subr.mxu0 0.0
    %277 = vmatpush1.msra.mxu0 0.0
    %278 = vmatprep.subr.mxu0 0.0
    %279 = vmatpush1.msra.mxu0 0.0
    %280 = vmatprep.subr.mxu0 0.0
    %281 = vmatpush1.msra.mxu0 0.0
    %282 = vmatprep.subr.mxu0 0.0
    %283 = vmatpush1.msra.mxu0 0.0
    %284 = vmatprep.subr.mxu0 0.0
    %285 = vmatpush1.msra.mxu0 0.0
    %286 = vmatprep.subr.mxu0 0.0
    %287 = vmatpush1.msra.mxu0 0.0
    %288 = vmatprep.subr.mxu0 0.0
    %289 = vmatpush1.msra.mxu0 0.0
    %290 = vmatprep.subr.mxu0 0.0
    %291 = vmatpush1.msra.mxu0 0.0
    %292 = vmatprep.subr.mxu0 0.0
    %293 = vmatpush1.msra.mxu0 0.0
    %294 = vmatprep.subr.mxu0 0.0
    %295 = vmatpush1.msra.mxu0 0.0
    %296 = vmatprep.subr.mxu0 0.0
    %297 = vmatpush1.msra.mxu0 0.0
    %298 = vmatprep.subr.mxu0 0.0
    %299 = vmatpush1.msra.mxu0 0.0
    %300 = vmatprep.subr.mxu0 0.0
    %301 = vmatpush1.msra.mxu0 0.0
    %302 = vmatprep.subr.mxu0 0.0
    %303 = vmatpush1.msra.mxu0 0.0
    %304 = vmatprep.subr.mxu0 0.0
    %305 = vmatpush1.msra.mxu0 0.0
    %306 = vmatprep.mubr.f32.mxu0 0.0
    %307 = vmatmul.mubr.f32.gmra.mrb[0].mxu0 %v240
    %v308 = vpop.f32.mrb[0].mxu0
    %v309 = vadd.f32 0.0, %v308
    %v310 = vpop.f32.mrb[0].mxu0
    %311 = vdwg.mxu0
    %v313 = vsel %vm90, %v238, 0
    %315 = vmatprep.subr.mxu0 0.0
    %316 = vmatpush1.msra.mxu0 1.0
    %317 = vmatprep.subr.mxu0 0.0
    %318 = vmatpush1.msra.mxu0 1.0
    %319 = vmatprep.subr.mxu0 0.0
    %320 = vmatpush1.msra.mxu0 1.0
    %321 = vmatprep.subr.mxu0 0.0
    %322 = vmatpush1.msra.mxu0 1.0
    %323 = vmatprep.subr.mxu0 0.0
    %324 = vmatpush1.msra.mxu0 0.0
    %325 = vmatprep.subr.mxu0 0.0
    %326 = vmatpush1.msra.mxu0 0.0
    %327 = vmatprep.subr.mxu0 0.0
    %328 = vmatpush1.msra.mxu0 0.0
    %329 = vmatprep.subr.mxu0 0.0
    %330 = vmatpush1.msra.mxu0 0.0
    %331 = vmatprep.subr.mxu0 0.0
    %332 = vmatpush1.msra.mxu0 0.0
    %333 = vmatprep.subr.mxu0 0.0
    %334 = vmatpush1.msra.mxu0 0.0
    %335 = vmatprep.subr.mxu0 0.0
    %336 = vmatpush1.msra.mxu0 0.0
    %337 = vmatprep.subr.mxu0 0.0
    %338 = vmatpush1.msra.mxu0 0.0
    %339 = vmatprep.subr.mxu0 0.0
    %340 = vmatpush1.msra.mxu0 0.0
    %341 = vmatprep.subr.mxu0 0.0
    %342 = vmatpush1.msra.mxu0 0.0
    %343 = vmatprep.subr.mxu0 0.0
    %344 = vmatpush1.msra.mxu0 0.0
    %345 = vmatprep.subr.mxu0 0.0
    %346 = vmatpush1.msra.mxu0 0.0
    %347 = vmatprep.subr.mxu0 0.0
    %348 = vmatpush1.msra.mxu0 0.0
    %349 = vmatprep.subr.mxu0 0.0
    %350 = vmatpush1.msra.mxu0 0.0
    %351 = vmatprep.subr.mxu0 0.0
    %352 = vmatpush1.msra.mxu0 0.0
    %353 = vmatprep.subr.mxu0 0.0
    %354 = vmatpush1.msra.mxu0 0.0
    %355 = vmatprep.subr.mxu0 0.0
    %356 = vmatpush1.msra.mxu0 0.0
    %357 = vmatprep.subr.mxu0 0.0
    %358 = vmatpush1.msra.mxu0 0.0
    %359 = vmatprep.subr.mxu0 0.0
    %360 = vmatpush1.msra.mxu0 0.0
    %361 = vmatprep.subr.mxu0 0.0
    %362 = vmatpush1.msra.mxu0 0.0
    %363 = vmatprep.subr.mxu0 0.0
    %364 = vmatpush1.msra.mxu0 0.0
    %365 = vmatprep.subr.mxu0 0.0
    %366 = vmatpush1.msra.mxu0 0.0
    %367 = vmatprep.subr.mxu0 0.0
    %368 = vmatpush1.msra.mxu0 0.0
    %369 = vmatprep.subr.mxu0 0.0
    %370 = vmatpush1.msra.mxu0 0.0
    %371 = vmatprep.subr.mxu0 0.0
    %372 = vmatpush1.msra.mxu0 0.0
    %373 = vmatprep.subr.mxu0 0.0
    %374 = vmatpush1.msra.mxu0 0.0
    %375 = vmatprep.subr.mxu0 0.0
    %376 = vmatpush1.msra.mxu0 0.0
    %377 = vmatprep.subr.mxu0 0.0
    %378 = vmatpush1.msra.mxu0 0.0
    %379 = vmatprep.mubr.f32.mxu0 0.0
    %380 = vmatmul.mubr.f32.gmra.mrb[0].mxu0 %v313
    %v381 = vpop.f32.mrb[0].mxu0
    %v382 = vadd.f32 0.0, %v381
    %v383 = vpop.f32.mrb[0].mxu0
    %384 = vdwg.mxu0
    %v385 = vmax.f32 %v309, 1e-24
    %v386 = vmax.f32 %v382, 1e-24
    %v387 = vrsqrt.pop %v385
    %v388 = vrsqrt.pop %v386
    %v389 = vmul.f32 %v161, %v387
    %v390 = vmul.f32 %v234, %v388
    %v391 = vld [vmem:[%s2] sm:$0x3]
    %v392 = vsub.f32 1.0, %v391
    %v393 = vmul.f32 %v392, 1e+30
    %v395 = vlaneseq
    %v396 = vshrl.u32 %v395, 7
    %v397 = vsub.s32 0, %v396
    %v398 = vrot.slane %v393, %v397
    %400 = vbcast.lane.b32.xlu0 %v398, 256
    %v401 = vpop.permute.xlu0 %400
    %v402 = vlaneseq
    %v403 = vshrl.u32 %v402, 7
    %v404 = vsub.s32 1, %v403
    %v405 = vrot.slane %v393, %v404
    %407 = vbcast.lane.b32.xlu0 %v405, 256
    %v408 = vpop.permute.xlu0 %407
    %v411 = vsub.f32 %v389, %v401
    %v412 = vsub.f32 %v390, %v408
    %415 = vset.pattern.permute.xlu0 0
    %416 = vperm.xlu0 %415, %v411
    %v417 = vpop.permute.xlu0 %416
    %418 = vset.pattern.permute.xlu0 0
    %419 = vperm.xlu0 %418, %v412
    %v420 = vpop.permute.xlu0 %419
    %v421 = vlaneseq
    %v422 = vand.u32 %v421, 127
    %v423 = vlaneseq
    %v424 = vshrl.u32 %v423, 7
    %v425 = vsub.s32 %v422, %v424
    %v426 = vrot.slane %v417, %v425
    %v427 = vlaneseq
    %v428 = vshrl.u32 %v427, 7
    %v429 = vsub.s32 %v422, %v428
    %v430 = vrot.slane %v420, %v429
    %vm431 = vcmask 1041409
    %v432 = vsel %vm431, %v430, %v426
    %vm434 = vcmask 58368
    %v435 = vsel %vm434, %v432, -inf
    %436 = vmax.xlane.f32.xlu0 %v435
    %v437 = vpop.xlane.xlu0 %436
    %v439 = vlaneseq
    %v440 = vshrl.u32 %v439, 7
    %v441 = vsub.s32 0, %v440
    %v442 = vrot.slane %v437, %v441
    %v443 = vlaneseq
    %v444 = vshrl.u32 %v443, 7
    %v445 = vsub.s32 1, %v444
    %v446 = vrot.slane %v437, %v445
    %v449 = vsub.f32 %v411, %v442
    %v450 = vsub.f32 %v412, %v446
    %v451 = vmul.f32 %v449, 1.442695
    %v452 = vpow.pop %v451
    %v453 = vmul.f32 %v450, 1.442695
    %v454 = vpow.pop %v453
    %457 = vset.pattern.permute.xlu0 0
    %458 = vperm.xlu0 %457, %v452
    %v459 = vpop.permute.xlu0 %458
    %460 = vset.pattern.permute.xlu0 0
    %461 = vperm.xlu0 %460, %v454
    %v462 = vpop.permute.xlu0 %461
    %v463 = vlaneseq
    %v464 = vshrl.u32 %v463, 7
    %v465 = vsub.s32 %v422, %v464
    %v466 = vrot.slane %v459, %v465
    %v467 = vlaneseq
    %v468 = vshrl.u32 %v467, 7
    %v469 = vsub.s32 %v422, %v468
    %v470 = vrot.slane %v462, %v469
    %v471 = vsel %vm431, %v470, %v466
    %v473 = vsel %vm434, %v471, 0.0
    %474 = vadd.xlane.f32.xlu0 %v473
    %v475 = vpop.xlane.xlu0 %474
    %v477 = vlaneseq
    %v478 = vshrl.u32 %v477, 7
    %v479 = vsub.s32 0, %v478
    %v480 = vrot.slane %v475, %v479
    %v481 = vlaneseq
    %v482 = vshrl.u32 %v481, 7
    %v483 = vsub.s32 1, %v482
    %v484 = vrot.slane %v475, %v483
    %v487 = vrcp.pop %v480
    %v488 = vmul.f32 %v452, %v487
    %v489 = vrcp.pop %v484
    %v490 = vmul.f32 %v454, %v489
    %493 = vset.pattern.permute.xlu0 0
    %494 = vperm.xlu0 %493, %v488
    %v495 = vpop.permute.xlu0 %494
    %496 = vset.pattern.permute.xlu0 0
    %497 = vperm.xlu0 %496, %v490
    %v498 = vpop.permute.xlu0 %497
    %v499 = vlaneseq
    %v500 = vshrl.u32 %v499, 7
    %v501 = vsub.s32 %v422, %v500
    %v502 = vrot.slane %v495, %v501
    %v503 = vlaneseq
    %v504 = vshrl.u32 %v503, 7
    %v505 = vsub.s32 %v422, %v504
    %v506 = vrot.slane %v498, %v505
    %v507 = vsel %vm431, %v506, %v502
    %509 = vst.msk [vmem:[#allocation7] sm:$0x3] %vm434, %v507
    // Predicated region
    $region22: #{_cosine_attention_impl.1} parent=1 // pred_check
      _
    $region23: #{_cosine_attention_impl.1} parent=1 // pred_check_branch
      %511 = sbr.rel (0) target = $region25
    $region24: #{_cosine_attention_impl.1} parent=1 // pred_region
      %s513 = ssub.s32 32, 32
      %514 = vsyncadd [#allocation4], %s513
      %s516 = sshll.u32 [#allocation7], 4
      %s517 = int_to_ptr.vmem [resolvable:$true] %s516
      %519 = dma.vmem_to_hbm [thread:$0]  %s517, 32, %s3, [#allocation4]
    $region25: #{_cosine_attention_impl.1} parent=1 // pred_fallthru
      _
    // Predicated region
    $region26: #{_cosine_attention_impl.1} parent=1 // pred_check
      _
    $region27: #{_cosine_attention_impl.1} parent=1 // pred_check_branch
      %521 = sbr.rel (0) target = $region29
    $region28: #{_cosine_attention_impl.1} parent=1 // pred_region
      %522 = dma.done [#allocation4], 32
    $region29: #{_cosine_attention_impl.1} parent=1 // pred_fallthru
      _
    %523 = vsyncpa [#allocation3], 1
    %524 = vsyncpa [#allocation6], 1
    %525 = vsyncpa [#allocation4], 1

</llo_original>
